<compile_context>
chip_gen: v7x
topology: tpu7x:2x2x1
jax: 0.10.0
libtpu: 0.0.40
codegen_flags: <defaults>
</compile_context>

<pallas_src>
import functools

import jax
import jax.numpy as jnp
from jax import lax
from jax.experimental import pallas as pl
from jax.experimental.pallas import tpu as pltpu

_LANE = 128
_SUBLANE = 8


def _round_up(v, m):
    return ((v + m - 1) // m) * m


# ---------------------------------------------------------------------------
# One-time parameter preparation (hoisted off the per-step / per-sequence path)
# ---------------------------------------------------------------------------
def prepare_cfc_params(wi, wh, bias, matmul_dtype=jnp.float32):
    """Pre-transpose / pad / cast the CfC weights once.

    wi: (H, D_in), wh: (H, H), bias: (H,)  -- PyTorch layouts.
    matmul_dtype=jnp.bfloat16 is recommended on v6e/v7x (f32 accumulation is
    kept either way); the elementwise update always runs in f32.
    """
    H, _ = wi.shape
    H_pad = _round_up(H, _LANE)
    f32 = jnp.float32
    wi_t = jnp.pad(wi.astype(f32).T, ((0, 0), (0, H_pad - H))).astype(matmul_dtype)
    wh_t = jnp.pad(wh.astype(f32).T, ((0, H_pad - H), (0, H_pad - H))).astype(matmul_dtype)
    b = jnp.pad(bias.astype(f32), (0, H_pad - H)).reshape(1, H_pad)
    return {"wi_t": wi_t, "wh_t": wh_t, "b": b}


# ---------------------------------------------------------------------------
# Kernel: grid = (batch_tiles, T); h carried in VMEM scratch along T
# ---------------------------------------------------------------------------
def _cfc_seq_kernel(x_ref, h0_ref, wi_ref, wh_ref, b_ref, out_ref, h_scratch,
                    *, neg_inv_tau):
    t = pl.program_id(1)

    @pl.when(t == 0)
    def _():
        # New batch tile: (re)load the initial hidden state into the carry.
        h_scratch[...] = h0_ref[...]

    h = h_scratch[...]                       # (TB, H_pad) f32 carry
    x = x_ref[0]                             # (TB, D_in)
    mm_dtype = wi_ref.dtype                  # bf16 on v6e/v7x if requested

    pre = jnp.dot(x.astype(mm_dtype), wi_ref[...],
                  preferred_element_type=jnp.float32,
                  precision=lax.Precision.HIGHEST)
    pre = pre + jnp.dot(h.astype(mm_dtype), wh_ref[...],
                        preferred_element_type=jnp.float32,
                        precision=lax.Precision.HIGHEST)
    pre = pre + b_ref[...]                   # (1, H_pad) broadcast

    # Elementwise update + tanh in f32 (native VPU/EUP path on all chips).
    new_h = h + neg_inv_tau * (h - jnp.tanh(pre))

    h_scratch[...] = new_h
    out_ref[0] = new_h.astype(out_ref.dtype)


# ---------------------------------------------------------------------------
# Jitted implementation (time-major).  tau is static -> -1/tau trace-time fold.
# ---------------------------------------------------------------------------
@functools.partial(jax.jit, static_argnames=("tau",))
def _cfc_sequence_impl(x_seq, h0, wi_t, wh_t, b_pad, *, tau):
    """x_seq: (T, B, D_in) time-major; h0: (B, H). Returns (T, B, H) f32."""
    T, B, d_in = x_seq.shape
    H = h0.shape[1]
    H_pad = wi_t.shape[1]

    # Batch tiling: sublane-aligned, <=256 rows per tile (pipelined for big B).
    tb = min(_round_up(B, _SUBLANE), 256)
    B_pad = _round_up(B, tb)

    f32 = jnp.float32
    x_p = jnp.pad(x_seq.astype(f32), ((0, 0), (0, B_pad - B), (0, 0)))
    h0_p = jnp.pad(h0.astype(f32), ((0, B_pad - B), (0, H_pad - H)))

    neg_inv_tau = -1.0 / float(tau)          # folded into the kernel as a constant
    kernel = functools.partial(_cfc_seq_kernel, neg_inv_tau=neg_inv_tau)

    w_bytes = wi_t.dtype.itemsize * (wi_t.size + wh_t.size) + 4 * b_pad.size
    cost = pl.CostEstimate(
        flops=2 * T * B_pad * (d_in + H_pad) * H_pad + 5 * T * B_pad * H_pad,
        transcendentals=T * B_pad * H_pad,
        bytes_accessed=4 * (x_p.size + h0_p.size + T * B_pad * H_pad) + w_bytes,
    )

    grid = (B_pad // tb, T)
    out_p = pl.pallas_call(
        kernel,
        out_shape=jax.ShapeDtypeStruct((T, B_pad, H_pad), f32),
        grid=grid,
        in_specs=[
            pl.BlockSpec((1, tb, d_in), lambda b, t: (t, b, 0)),   # x_t tile
            pl.BlockSpec((tb, H_pad), lambda b, t: (b, 0)),        # h0 tile
            pl.BlockSpec((d_in, H_pad), lambda b, t: (0, 0)),      # Wi^T (resident)
            pl.BlockSpec((H_pad, H_pad), lambda b, t: (0, 0)),     # Wh^T (resident)
            pl.BlockSpec((1, H_pad), lambda b, t: (0, 0)),         # bias (resident)
        ],
        out_specs=pl.BlockSpec((1, tb, H_pad), lambda b, t: (t, b, 0)),
        scratch_shapes=[pltpu.VMEM((tb, H_pad), f32)],             # h carry
        compiler_params=pltpu.CompilerParams(
            dimension_semantics=("parallel", "arbitrary"),
            vmem_limit_bytes=32 << 20,
        ),
        cost_estimate=cost,
    )(x_p, h0_p, wi_t, wh_t, b_pad)

    return out_p[:, :B, :H]


# ---------------------------------------------------------------------------
# Public wrappers
# ---------------------------------------------------------------------------
def cfc_cell_forward(x, h, params, tau=1.0):
    """Single CfC step (matches the PyTorch module). Returns (new_h, new_h)."""
    out = _cfc_sequence_impl(x[None], h, params["wi_t"], params["wh_t"],
                             params["b"], tau=float(tau))
    new_h = out[0].astype(x.dtype)
    return new_h, new_h


def cfc_sequence_forward(x_seq, h0, params, tau=1.0):
    """Fused sequence: x_seq (B, T, D_in) batch-first, h0 (B, H).

    Runs all T steps inside one pallas_call (weights VMEM-resident, hidden
    state carried in VMEM scratch). Returns (hidden states (B, T, H),
    final hidden (B, H)).
    """
    x_tm = jnp.swapaxes(x_seq, 0, 1)                     # one transpose / sequence
    out = _cfc_sequence_impl(x_tm, h0, params["wi_t"], params["wh_t"],
                             params["b"], tau=float(tau))
    h_seq = jnp.swapaxes(out, 0, 1).astype(x_seq.dtype)  # (B, T, H)
    return h_seq, h_seq[:, -1, :]


# ---------------------------------------------------------------------------
# Reference (mirrors the PyTorch f32 math; HIGHEST precision dots)
# ---------------------------------------------------------------------------
def _reference_step(x, h, wi, wh, bias, tau=1.0):
    pre = (jnp.dot(x, wi.T, precision=lax.Precision.HIGHEST)
           + jnp.dot(h, wh.T, precision=lax.Precision.HIGHEST) + bias)
    return h + (-1.0 / tau) * (h - jnp.tanh(pre))


if __name__ == "__main__":
    # Shapes consistent with the spec: input = torch.randn(5, 3, 10), hidden=32.
    batch, seq_len, input_size, hidden_size = 5, 3, 10, 32

    key = jax.random.PRNGKey(0)
    k_x, k_h, k_wi, k_wh = jax.random.split(key, 4)
    x_seq = jax.random.normal(k_x, (batch, seq_len, input_size), dtype=jnp.float32)
    h0 = jax.random.normal(k_h, (batch, hidden_size), dtype=jnp.float32)
    wi = jax.random.normal(k_wi, (hidden_size, input_size), dtype=jnp.float32)
    wh = jax.random.normal(k_wh, (hidden_size, hidden_size), dtype=jnp.float32)
    bias = jnp.zeros((hidden_size,), dtype=jnp.float32)

    params = prepare_cfc_params(wi, wh, bias)   # one-time weight prep

    # --- per-step API (module-equivalent forward), stepped over the sequence ---
    h = h0
    h_ref = h0
    for t in range(seq_len):
        x_t = x_seq[:, t, :]
        h, h_again = cfc_cell_forward(x_t, h, params, tau=1.0)
        assert jnp.array_equal(h, h_again)
        h_ref = _reference_step(x_t, h_ref, wi, wh, bias, tau=1.0)
    h = jax.block_until_ready(h)
    assert h.shape == (batch, hidden_size)
    assert jnp.allclose(h, h_ref, atol=1e-5, rtol=1e-5), "per-step mismatch vs reference"

    # --- fused-sequence API: one pallas_call over all T steps ---
    h_seq, h_last = cfc_sequence_forward(x_seq, h0, params, tau=1.0)
    h_seq = jax.block_until_ready(h_seq)
    assert h_seq.shape == (batch, seq_len, hidden_size)
    assert jnp.allclose(h_last, h_ref, atol=1e-5, rtol=1e-5), "fused final-h mismatch"
    hr = h0
    for t in range(seq_len):
        hr = _reference_step(x_seq[:, t, :], hr, wi, wh, bias, tau=1.0)
        assert jnp.allclose(h_seq[:, t, :], hr, atol=1e-5, rtol=1e-5), f"fused step {t} mismatch"

    # --- different (static) tau exercises the trace-time -1/tau fold ---
    h2, _ = cfc_cell_forward(x_seq[:, 0, :], h0, params, tau=2.0)
    h2 = jax.block_until_ready(h2)
    ref2 = _reference_step(x_seq[:, 0, :], h0, wi, wh, bias, tau=2.0)
    assert jnp.allclose(h2, ref2, atol=1e-5, rtol=1e-5), "mismatch vs reference (tau=2)"

    print("KERNEL_OK")
</pallas_src>

<mosaic_0001>
module attributes {stable_mosaic.version = 11 : i64} {
  func.func @_cfc_seq_kernel(%arg0: i32, %arg1: i32, %arg2: memref<1x8x10xf32, #tpu.memory_space<vmem>>, %arg3: memref<8x128xf32, #tpu.memory_space<vmem>>, %arg4: memref<10x128xf32, #tpu.memory_space<vmem>>, %arg5: memref<128x128xf32, #tpu.memory_space<vmem>>, %arg6: memref<1x128xf32, #tpu.memory_space<vmem>>, %arg7: memref<1x8x128xf32, #tpu.memory_space<vmem>>, %arg8: memref<8x128xf32, #tpu.memory_space<vmem>>) attributes {dimension_semantics = [#tpu.dimension_semantics<parallel>, #tpu.dimension_semantics<arbitrary>], iteration_bounds = array<i64: 1, 1>, scalar_prefetch = 0 : i64, scratch_operands = 1 : i64, tpu.core_type = #tpu.core_type<tc>, window_params = [{transform_indices = @transform_0, window_bounds = array<i64: 1, 8, 10>}, {transform_indices = @transform_1, window_bounds = array<i64: 8, 128>}, {pipeline_mode = #tpu.pipeline_mode<synchronous>, transform_indices = @transform_2, window_bounds = array<i64: 10, 128>}, {pipeline_mode = #tpu.pipeline_mode<synchronous>, transform_indices = @transform_3, window_bounds = array<i64: 128, 128>}, {pipeline_mode = #tpu.pipeline_mode<synchronous>, transform_indices = @transform_4, window_bounds = array<i64: 1, 128>}, {transform_indices = @transform_5, window_bounds = array<i64: 1, 8, 128>}]} {
    %c0_i32 = arith.constant 0 : i32
    %0 = arith.cmpi eq, %arg1, %c0_i32 : i32
    %1 = arith.extui %0 : i1 to i32
    %c0_i32_0 = arith.constant 0 : i32
    %2 = arith.cmpi ne, %1, %c0_i32_0 : i32
    scf.if %2 {
      %c0_18 = arith.constant 0 : index
      %c0_19 = arith.constant 0 : index
      %23 = vector.load %arg3[%c0_18, %c0_19] : memref<8x128xf32, #tpu.memory_space<vmem>>, vector<8x128xf32>
      %c0_20 = arith.constant 0 : index
      %c0_21 = arith.constant 0 : index
      %24 = vector.load %arg8[%c0_20, %c0_21] : memref<8x128xf32, #tpu.memory_space<vmem>>, vector<8x128xf32>
      tpu.vector_store %arg8[%c0_20, %c0_21], %23 {strides = array<i32>} : memref<8x128xf32, #tpu.memory_space<vmem>>, vector<8x128xf32>,
    } else {
    }
    %c0 = arith.constant 0 : index
    %c0_1 = arith.constant 0 : index
    %3 = vector.load %arg8[%c0, %c0_1] : memref<8x128xf32, #tpu.memory_space<vmem>>, vector<8x128xf32>
    %c0_2 = arith.constant 0 : index
    %c0_3 = arith.constant 0 : index
    %c0_4 = arith.constant 0 : index
    %4 = vector.load %arg2[%c0_2, %c0_3, %c0_4] : memref<1x8x10xf32, #tpu.memory_space<vmem>>, vector<1x8x10xf32>
    %5 = vector.shape_cast %4 : vector<1x8x10xf32> to vector<8x10xf32>
    %c0_5 = arith.constant 0 : index
    %c0_6 = arith.constant 0 : index
    %6 = vector.load %arg4[%c0_5, %c0_6] : memref<10x128xf32, #tpu.memory_space<vmem>>, vector<10x128xf32>
    %cst = arith.constant dense<0.000000e+00> : vector<8x128xf32>
    %7 = tpu.matmul %5, %6, %cst {dimension_numbers = #tpu.dot_dimension_numbers<[1], [0], [0], [1], [0, 0, 1, 1], [], []>, precision = #tpu.contract_precision<fp32>} : vector<8x10xf32>, vector<10x128xf32>, vector<8x128xf32> -> vector<8x128xf32>
    %c0_7 = arith.constant 0 : index
    %c0_8 = arith.constant 0 : index
    %8 = vector.load %arg5[%c0_7, %c0_8] : memref<128x128xf32, #tpu.memory_space<vmem>>, vector<128x128xf32>
    %cst_9 = arith.constant dense<0.000000e+00> : vector<8x128xf32>
    %9 = tpu.matmul %3, %8, %cst_9 {dimension_numbers = #tpu.dot_dimension_numbers<[1], [0], [0], [1], [0, 0, 1, 1], [], []>, precision = #tpu.contract_precision<fp32>} : vector<8x128xf32>, vector<128x128xf32>, vector<8x128xf32> -> vector<8x128xf32>
    %10 = arith.addf %7, %9 : vector<8x128xf32>
    %c0_10 = arith.constant 0 : index
    %c0_11 = arith.constant 0 : index
    %11 = vector.load %arg6[%c0_10, %c0_11] : memref<1x128xf32, #tpu.memory_space<vmem>>, vector<1x128xf32>
    %12 = vector.broadcast %11 : vector<1x128xf32> to vector<8x128xf32>
    %13 = arith.addf %10, %12 : vector<8x128xf32>
    %14 = math.tanh %13 : vector<8x128xf32>
    %15 = arith.subf %3, %14 : vector<8x128xf32>
    %cst_12 = arith.constant -1.000000e+00 : f32
    %16 = vector.broadcast %cst_12 : f32 to vector<8x128xf32>
    %17 = arith.mulf %16, %15 : vector<8x128xf32>
    %18 = arith.addf %3, %17 : vector<8x128xf32>
    %c0_13 = arith.constant 0 : index
    %c0_14 = arith.constant 0 : index
    %19 = vector.load %arg8[%c0_13, %c0_14] : memref<8x128xf32, #tpu.memory_space<vmem>>, vector<8x128xf32>
    tpu.vector_store %arg8[%c0_13, %c0_14], %18 {strides = array<i32>} : memref<8x128xf32, #tpu.memory_space<vmem>>, vector<8x128xf32>,
    %c0_15 = arith.constant 0 : index
    %c0_16 = arith.constant 0 : index
    %c0_17 = arith.constant 0 : index
    %20 = vector.load %arg7[%c0_15, %c0_16, %c0_17] : memref<1x8x128xf32, #tpu.memory_space<vmem>>, vector<1x8x128xf32>
    %21 = vector.shape_cast %20 : vector<1x8x128xf32> to vector<8x128xf32>
    %22 = vector.shape_cast %18 : vector<8x128xf32> to vector<1x8x128xf32>
    tpu.vector_store %arg7[%c0_15, %c0_16, %c0_17], %22 {strides = array<i32>} : memref<1x8x128xf32, #tpu.memory_space<vmem>>, vector<1x8x128xf32>,
    return
  }
  func.func @transform_0(%arg0: i32, %arg1: i32) -> (i32, i32, i32) {
    %c0_i32 = arith.constant 0 : i32
    %c0_i32_0 = arith.constant 0 : i32
    return %arg1, %arg0, %c0_i32 : i32, i32, i32
  }
  func.func @transform_1(%arg0: i32, %arg1: i32) -> (i32, i32) {
    %c0_i32 = arith.constant 0 : i32
    %c0_i32_0 = arith.constant 0 : i32
    return %arg0, %c0_i32 : i32, i32
  }
  func.func @transform_2(%arg0: i32, %arg1: i32) -> (i32, i32) {
    %c0_i32 = arith.constant 0 : i32
    %c0_i32_0 = arith.constant 0 : i32
    %c0_i32_1 = arith.constant 0 : i32
    return %c0_i32, %c0_i32_0 : i32, i32
  }
  func.func @transform_3(%arg0: i32, %arg1: i32) -> (i32, i32) {
    %c0_i32 = arith.constant 0 : i32
    %c0_i32_0 = arith.constant 0 : i32
    %c0_i32_1 = arith.constant 0 : i32
    return %c0_i32, %c0_i32_0 : i32, i32
  }
  func.func @transform_4(%arg0: i32, %arg1: i32) -> (i32, i32) {
    %c0_i32 = arith.constant 0 : i32
    %c0_i32_0 = arith.constant 0 : i32
    %c0_i32_1 = arith.constant 0 : i32
    return %c0_i32, %c0_i32_0 : i32, i32
  }
  func.func @transform_5(%arg0: i32, %arg1: i32) -> (i32, i32, i32) {
    %c0_i32 = arith.constant 0 : i32
    %c0_i32_0 = arith.constant 0 : i32
    return %arg1, %arg0, %c0_i32 : i32, i32, i32
  }
}

</mosaic_0001>

<llo_original>
// kernel: _cfc_sequence_impl.1
$region0: #{_cfc_sequence_impl.1}
  #allocation0 [shape = 'u32[]', space=smem, size = 0x4, offset = 0x4, fixed_abs, tag = 'smem constant byte address 0x4 - core index']
  #allocation1 [shape = 'u32[144,128]{1,0:T(1,128)}', space=vmem, size = 0x12000, scoped, tag = 'internal scratch']
  #allocation2 [shape = 'f32[8,128]{1,0:T(8,128)}', space=vmem, size = 0x1000, scoped, tag = 'scratch operand']
  %s0 = inlined_call_operand.vmem [shape: f32[1,8,10], index: 0, kind: input, shape index: {}]
  %s1 = inlined_call_operand.vmem [shape: f32[8,128], index: 1, kind: input, shape index: {}]
  %s2 = inlined_call_operand.vmem [shape: f32[10,128], index: 2, kind: input, shape index: {}]
  %s3 = inlined_call_operand.hbm [shape: f32[128,128], index: 3, kind: input, shape index: {}]
  %s4 = inlined_call_operand.vmem [shape: f32[1,128], index: 4, kind: input, shape index: {}]
  %s5 = inlined_call_operand.vmem [shape: f32[1,8,128], index: 5, kind: output, shape index: {}]
  %s6 = sld [smem:[#allocation0]]
  $region38: #{_cfc_sequence_impl.1} parent=0
    _
  %s8 = ssub.s32 1, %s6
  %s9 = scalar_select 0, %s8, %s6
  $region1: #{_cfc_sequence_impl.1} parent=0
    #allocation3 [shape = 'u8[65536]{0}', space=vmem, size = 0x10000, scoped, tag = 'input window, operand 3, single buffered']
    #allocation4 [shape = 's32[1]{0}', space=sflag, size = 0x4, scoped, tag = 'scoped memory for _cfc_sequence_impl.1']
    %10 = vsyncpa [#allocation4], 0
    // Predicated region
    $region2: #{_cfc_sequence_impl.1} parent=1 // pred_check
      _
    $region3: #{_cfc_sequence_impl.1} parent=1 // pred_check_branch
      %12 = sbr.rel (0) target = $region5
    $region4: #{_cfc_sequence_impl.1} parent=1 // pred_region
      _
    $region5: #{_cfc_sequence_impl.1} parent=1 // pred_fallthru
      _
    // Predicated region
    $region6: #{_cfc_sequence_impl.1} parent=1 // pred_check
      _
    $region7: #{_cfc_sequence_impl.1} parent=1 // pred_check_branch
      %14 = sbr.rel (0) target = $region9
    $region8: #{_cfc_sequence_impl.1} parent=1 // pred_region
      _
    $region9: #{_cfc_sequence_impl.1} parent=1 // pred_fallthru
      _
    // Predicated region
    $region10: #{_cfc_sequence_impl.1} parent=1 // pred_check
      _
    $region11: #{_cfc_sequence_impl.1} parent=1 // pred_check_branch
      %16 = sbr.rel (0) target = $region13
    $region12: #{_cfc_sequence_impl.1} parent=1 // pred_region
      _
    $region13: #{_cfc_sequence_impl.1} parent=1 // pred_fallthru
      _
    // Predicated region
    $region14: #{_cfc_sequence_impl.1} parent=1 // pred_check
      _
    $region15: #{_cfc_sequence_impl.1} parent=1 // pred_check_branch
      %18 = sbr.rel (0) target = $region17
    $region16: #{_cfc_sequence_impl.1} parent=1 // pred_region
      %s20 = ssub.s32 2048, 2048
      %21 = vsyncadd [#allocation4], %s20
      %s22 = sshll.u32 [#allocation3], 4
      %s23 = int_to_ptr.vmem [resolvable:$true] %s22
      %28 = dma.hbm_to_vmem [thread:$0]  %s3, 2048, %s23, [#allocation4], 128, 128, 8
    $region17: #{_cfc_sequence_impl.1} parent=1 // pred_fallthru
      _
    // Predicated region
    $region18: #{_cfc_sequence_impl.1} parent=1 // pred_check
      _
    $region19: #{_cfc_sequence_impl.1} parent=1 // pred_check_branch
      %30 = sbr.rel (0) target = $region21
    $region20: #{_cfc_sequence_impl.1} parent=1 // pred_region
      _
    $region21: #{_cfc_sequence_impl.1} parent=1 // pred_fallthru
      _
    // Predicated region
    $region22: #{_cfc_sequence_impl.1} parent=1 // pred_check
      _
    $region23: #{_cfc_sequence_impl.1} parent=1 // pred_check_branch
      %32 = sbr.rel (0) target = $region25
    $region24: #{_cfc_sequence_impl.1} parent=1 // pred_region
      %33 = dma.done [#allocation4], 2048
    $region25: #{_cfc_sequence_impl.1} parent=1 // pred_fallthru
      _
    %p34 = scmp.eq.s32.totalorder 0, 0
    // Predicated region
    $region26: #{_cfc_sequence_impl.1} parent=1 // pred_check
      %p35 = pneg %p34
    $region27: #{_cfc_sequence_impl.1} parent=1 // pred_check_branch
      %37 = sbr.rel (%p35) target = $region29
    $region28: #{_cfc_sequence_impl.1} parent=1 // pred_region
      %v38 = vld [vmem:[%s1] sm:$0xff]
      %39 = vst [vmem:[#allocation2] sm:$0xff] %v38
    $region29: #{_cfc_sequence_impl.1} parent=1 // pred_fallthru
      _
    %v40 = vld [vmem:[#allocation2] sm:$0xff]
    %v41 = vld [vmem:[%s0] sm:$0xff]
    %v42 = vld [vmem:[%s2] sm:$0xff]
    %v43 = vld [vmem:[%s2 + $0x8] sm:$0x3]
    %v44 = vld [vmem:[#allocation3] sm:$0xff]
    %v45 = vld [vmem:[#allocation3 + $0x8] sm:$0xff]
    %v46 = vld [vmem:[#allocation3 + $0x10] sm:$0xff]
    %v47 = vld [vmem:[#allocation3 + $0x18] sm:$0xff]
    %v48 = vld [vmem:[#allocation3 + $0x20] sm:$0xff]
    %v49 = vld [vmem:[#allocation3 + $0x28] sm:$0xff]
    %v50 = vld [vmem:[#allocation3 + $0x30] sm:$0xff]
    %v51 = vld [vmem:[#allocation3 + $0x38] sm:$0xff]
    %v52 = vld [vmem:[#allocation3 + $0x40] sm:$0xff]
    %v53 = vld [vmem:[#allocation3 + $0x48] sm:$0xff]
    %v54 = vld [vmem:[#allocation3 + $0x50] sm:$0xff]
    %v55 = vld [vmem:[#allocation3 + $0x58] sm:$0xff]
    %v56 = vld [vmem:[#allocation3 + $0x60] sm:$0xff]
    %v57 = vld [vmem:[#allocation3 + $0x68] sm:$0xff]
    %v58 = vld [vmem:[#allocation3 + $0x70] sm:$0xff]
    %v59 = vld [vmem:[#allocation3 + $0x78] sm:$0xff]
    %60 = vmatprep.subr.mxu0 0.0
    %v61 = vand.u32 %v44, 4294901760
    %62 = vmatpush1.msra.mxu0 %v61
    %63 = vmatprep.subr.mxu0 0.0
    %v64 = vand.u32 %v45, 4294901760
    %65 = vmatpush1.msra.mxu0 %v64
    %66 = vmatprep.subr.mxu0 0.0
    %v67 = vand.u32 %v46, 4294901760
    %68 = vmatpush1.msra.mxu0 %v67
    %69 = vmatprep.subr.mxu0 0.0
    %v70 = vand.u32 %v47, 4294901760
    %71 = vmatpush1.msra.mxu0 %v70
    %72 = vmatprep.subr.mxu0 0.0
    %v73 = vand.u32 %v48, 4294901760
    %74 = vmatpush1.msra.mxu0 %v73
    %75 = vmatprep.subr.mxu0 0.0
    %v76 = vand.u32 %v49, 4294901760
    %77 = vmatpush1.msra.mxu0 %v76
    %78 = vmatprep.subr.mxu0 0.0
    %v79 = vand.u32 %v50, 4294901760
    %80 = vmatpush1.msra.mxu0 %v79
    %81 = vmatprep.subr.mxu0 0.0
    %v82 = vand.u32 %v51, 4294901760
    %83 = vmatpush1.msra.mxu0 %v82
    %84 = vmatprep.subr.mxu0 0.0
    %v85 = vand.u32 %v52, 4294901760
    %86 = vmatpush1.msra.mxu0 %v85
    %87 = vmatprep.subr.mxu0 0.0
    %v88 = vand.u32 %v53, 4294901760
    %89 = vmatpush1.msra.mxu0 %v88
    %90 = vmatprep.subr.mxu0 0.0
    %v91 = vand.u32 %v54, 4294901760
    %92 = vmatpush1.msra.mxu0 %v91
    %93 = vmatprep.subr.mxu0 0.0
    %v94 = vand.u32 %v55, 4294901760
    %95 = vmatpush1.msra.mxu0 %v94
    %96 = vmatprep.subr.mxu0 0.0
    %v97 = vand.u32 %v56, 4294901760
    %98 = vmatpush1.msra.mxu0 %v97
    %99 = vmatprep.subr.mxu0 0.0
    %v100 = vand.u32 %v57, 4294901760
    %101 = vmatpush1.msra.mxu0 %v100
    %102 = vmatprep.subr.mxu0 0.0
    %v103 = vand.u32 %v58, 4294901760
    %104 = vmatpush1.msra.mxu0 %v103
    %105 = vmatprep.subr.mxu0 0.0
    %v106 = vand.u32 %v59, 4294901760
    %107 = vmatpush1.msra.mxu0 %v106
    %108 = vmatprep.subr.mxu0 0.0
    %109 = vmatpush1.msra.mxu0 0.0
    %110 = vmatprep.subr.mxu0 0.0
    %111 = vmatpush1.msra.mxu0 0.0
    %112 = vmatprep.subr.mxu0 0.0
    %113 = vmatpush1.msra.mxu0 0.0
    %114 = vmatprep.subr.mxu0 0.0
    %115 = vmatpush1.msra.mxu0 0.0
    %116 = vmatprep.subr.mxu0 0.0
    %117 = vmatpush1.msra.mxu0 0.0
    %118 = vmatprep.subr.mxu0 0.0
    %119 = vmatpush1.msra.mxu0 0.0
    %120 = vmatprep.subr.mxu0 0.0
    %121 = vmatpush1.msra.mxu0 0.0
    %122 = vmatprep.subr.mxu0 0.0
    %123 = vmatpush1.msra.mxu0 0.0
    %124 = vmatprep.subr.mxu0 0.0
    %125 = vmatpush1.msra.mxu0 0.0
    %126 = vmatprep.subr.mxu0 0.0
    %127 = vmatpush1.msra.mxu0 0.0
    %128 = vmatprep.subr.mxu0 0.0
    %129 = vmatpush1.msra.mxu0 0.0
    %130 = vmatprep.subr.mxu0 0.0
    %131 = vmatpush1.msra.mxu0 0.0
    %132 = vmatprep.subr.mxu0 0.0
    %133 = vmatpush1.msra.mxu0 0.0
    %134 = vmatprep.subr.mxu0 0.0
    %135 = vmatpush1.msra.mxu0 0.0
    %136 = vmatprep.subr.mxu0 0.0
    %137 = vmatpush1.msra.mxu0 0.0
    %138 = vmatprep.subr.mxu0 0.0
    %139 = vmatpush1.msra.mxu0 0.0
    %140 = vmatprep.mubr.f32.mxu0 0.0
    %v141 = vand.u32 %v40, 4294901760
    %v142 = vsub.f32 %v40, %v141
    %v143 = vand.u32 %v142, 4294901760
    %v144 = vsub.f32 %v142, %v143
    %v145 = vand.u32 %v144, 4294901760
    %146 = vmatmul.mubr.f32.gmra.mrb[0].mxu0 %v145
    %v147 = vpop.f32.mrb[0].mxu0
    %v148 = vadd.f32 0.0, %v147
    %v149 = vpop.f32.mrb[0].mxu0
    %150 = vdwg.mxu0
    %151 = vmatprep.subr.mxu0 0.0
    %v152 = vand.u32 %v44, 4294901760
    %v153 = vsub.f32 %v44, %v152
    %v154 = vand.u32 %v153, 4294901760
    %v155 = vsub.f32 %v153, %v154
    %v156 = vand.u32 %v155, 4294901760
    %157 = vmatpush1.msra.mxu0 %v156
    %158 = vmatprep.subr.mxu0 0.0
    %v159 = vand.u32 %v45, 4294901760
    %v160 = vsub.f32 %v45, %v159
    %v161 = vand.u32 %v160, 4294901760
    %v162 = vsub.f32 %v160, %v161
    %v163 = vand.u32 %v162, 4294901760
    %164 = vmatpush1.msra.mxu0 %v163
    %165 = vmatprep.subr.mxu0 0.0
    %v166 = vand.u32 %v46, 4294901760
    %v167 = vsub.f32 %v46, %v166
    %v168 = vand.u32 %v167, 4294901760
    %v169 = vsub.f32 %v167, %v168
    %v170 = vand.u32 %v169, 4294901760
    %171 = vmatpush1.msra.mxu0 %v170
    %172 = vmatprep.subr.mxu0 0.0
    %v173 = vand.u32 %v47, 4294901760
    %v174 = vsub.f32 %v47, %v173
    %v175 = vand.u32 %v174, 4294901760
    %v176 = vsub.f32 %v174, %v175
    %v177 = vand.u32 %v176, 4294901760
    %178 = vmatpush1.msra.mxu0 %v177
    %179 = vmatprep.subr.mxu0 0.0
    %v180 = vand.u32 %v48, 4294901760
    %v181 = vsub.f32 %v48, %v180
    %v182 = vand.u32 %v181, 4294901760
    %v183 = vsub.f32 %v181, %v182
    %v184 = vand.u32 %v183, 4294901760
    %185 = vmatpush1.msra.mxu0 %v184
    %186 = vmatprep.subr.mxu0 0.0
    %v187 = vand.u32 %v49, 4294901760
    %v188 = vsub.f32 %v49, %v187
    %v189 = vand.u32 %v188, 4294901760
    %v190 = vsub.f32 %v188, %v189
    %v191 = vand.u32 %v190, 4294901760
    %192 = vmatpush1.msra.mxu0 %v191
    %193 = vmatprep.subr.mxu0 0.0
    %v194 = vand.u32 %v50, 4294901760
    %v195 = vsub.f32 %v50, %v194
    %v196 = vand.u32 %v195, 4294901760
    %v197 = vsub.f32 %v195, %v196
    %v198 = vand.u32 %v197, 4294901760
    %199 = vmatpush1.msra.mxu0 %v198
    %200 = vmatprep.subr.mxu0 0.0
    %v201 = vand.u32 %v51, 4294901760
    %v202 = vsub.f32 %v51, %v201
    %v203 = vand.u32 %v202, 4294901760
    %v204 = vsub.f32 %v202, %v203
    %v205 = vand.u32 %v204, 4294901760
    %206 = vmatpush1.msra.mxu0 %v205
    %207 = vmatprep.subr.mxu0 0.0
    %v208 = vand.u32 %v52, 4294901760
    %v209 = vsub.f32 %v52, %v208
    %v210 = vand.u32 %v209, 4294901760
    %v211 = vsub.f32 %v209, %v210
    %v212 = vand.u32 %v211, 4294901760
    %213 = vmatpush1.msra.mxu0 %v212
    %214 = vmatprep.subr.mxu0 0.0
    %v215 = vand.u32 %v53, 4294901760
    %v216 = vsub.f32 %v53, %v215
    %v217 = vand.u32 %v216, 4294901760
    %v218 = vsub.f32 %v216, %v217
    %v219 = vand.u32 %v218, 4294901760
    %220 = vmatpush1.msra.mxu0 %v219
    %221 = vmatprep.subr.mxu0 0.0
    %v222 = vand.u32 %v54, 4294901760
    %v223 = vsub.f32 %v54, %v222
    %v224 = vand.u32 %v223, 4294901760
    %v225 = vsub.f32 %v223, %v224
    %v226 = vand.u32 %v225, 4294901760
    %227 = vmatpush1.msra.mxu0 %v226
    %228 = vmatprep.subr.mxu0 0.0
    %v229 = vand.u32 %v55, 4294901760
    %v230 = vsub.f32 %v55, %v229
    %v231 = vand.u32 %v230, 4294901760
    %v232 = vsub.f32 %v230, %v231
    %v233 = vand.u32 %v232, 4294901760
    %234 = vmatpush1.msra.mxu0 %v233
    %235 = vmatprep.subr.mxu0 0.0
    %v236 = vand.u32 %v56, 4294901760
    %v237 = vsub.f32 %v56, %v236
    %v238 = vand.u32 %v237, 4294901760
    %v239 = vsub.f32 %v237, %v238
    %v240 = vand.u32 %v239, 4294901760
    %241 = vmatpush1.msra.mxu0 %v240
    %242 = vmatprep.subr.mxu0 0.0
    %v243 = vand.u32 %v57, 4294901760
    %v244 = vsub.f32 %v57, %v243
    %v245 = vand.u32 %v244, 4294901760
    %v246 = vsub.f32 %v244, %v245
    %v247 = vand.u32 %v246, 4294901760
    %248 = vmatpush1.msra.mxu0 %v247
    %249 = vmatprep.subr.mxu0 0.0
    %v250 = vand.u32 %v58, 4294901760
    %v251 = vsub.f32 %v58, %v250
    %v252 = vand.u32 %v251, 4294901760
    %v253 = vsub.f32 %v251, %v252
    %v254 = vand.u32 %v253, 4294901760
    %255 = vmatpush1.msra.mxu0 %v254
    %256 = vmatprep.subr.mxu0 0.0
    %v257 = vand.u32 %v59, 4294901760
    %v258 = vsub.f32 %v59, %v257
    %v259 = vand.u32 %v258, 4294901760
    %v260 = vsub.f32 %v258, %v259
    %v261 = vand.u32 %v260, 4294901760
    %262 = vmatpush1.msra.mxu0 %v261
    %263 = vmatprep.subr.mxu0 0.0
    %264 = vmatpush1.msra.mxu0 0.0
    %265 = vmatprep.subr.mxu0 0.0
    %266 = vmatpush1.msra.mxu0 0.0
    %267 = vmatprep.subr.mxu0 0.0
    %268 = vmatpush1.msra.mxu0 0.0
    %269 = vmatprep.subr.mxu0 0.0
    %270 = vmatpush1.msra.mxu0 0.0
    %271 = vmatprep.subr.mxu0 0.0
    %272 = vmatpush1.msra.mxu0 0.0
    %273 = vmatprep.subr.mxu0 0.0
    %274 = vmatpush1.msra.mxu0 0.0
    %275 = vmatprep.subr.mxu0 0.0
    %276 = vmatpush1.msra.mxu0 0.0
    %277 = vmatprep.subr.mxu0 0.0
    %278 = vmatpush1.msra.mxu0 0.0
    %279 = vmatprep.subr.mxu0 0.0
    %280 = vmatpush1.msra.mxu0 0.0
    %281 = vmatprep.subr.mxu0 0.0
    %282 = vmatpush1.msra.mxu0 0.0
    %283 = vmatprep.subr.mxu0 0.0
    %284 = vmatpush1.msra.mxu0 0.0
    %285 = vmatprep.subr.mxu0 0.0
    %286 = vmatpush1.msra.mxu0 0.0
    %287 = vmatprep.subr.mxu0 0.0
    %288 = vmatpush1.msra.mxu0 0.0
    %289 = vmatprep.subr.mxu0 0.0
    %290 = vmatpush1.msra.mxu0 0.0
    %291 = vmatprep.subr.mxu0 0.0
    %292 = vmatpush1.msra.mxu0 0.0
    %293 = vmatprep.subr.mxu0 0.0
    %294 = vmatpush1.msra.mxu0 0.0
    %295 = vmatprep.mubr.f32.mxu0 0.0
    %v296 = vand.u32 %v40, 4294901760
    %297 = vmatmul.mubr.f32.gmra.mrb[0].mxu0 %v296
    %v298 = vpop.f32.mrb[0].mxu0
    %v299 = vadd.f32 %v148, %v298
    %v300 = vpop.f32.mrb[0].mxu0
    %301 = vdwg.mxu0
    %302 = vmatprep.subr.mxu0 0.0
    %v303 = vand.u32 %v44, 4294901760
    %v304 = vsub.f32 %v44, %v303
    %305 = vmatpush1.msra.mxu0 %v304
    %306 = vmatprep.subr.mxu0 0.0
    %v307 = vand.u32 %v45, 4294901760
    %v308 = vsub.f32 %v45, %v307
    %309 = vmatpush1.msra.mxu0 %v308
    %310 = vmatprep.subr.mxu0 0.0
    %v311 = vand.u32 %v46, 4294901760
    %v312 = vsub.f32 %v46, %v311
    %313 = vmatpush1.msra.mxu0 %v312
    %314 = vmatprep.subr.mxu0 0.0
    %v315 = vand.u32 %v47, 4294901760
    %v316 = vsub.f32 %v47, %v315
    %317 = vmatpush1.msra.mxu0 %v316
    %318 = vmatprep.subr.mxu0 0.0
    %v319 = vand.u32 %v48, 4294901760
    %v320 = vsub.f32 %v48, %v319
    %321 = vmatpush1.msra.mxu0 %v320
    %322 = vmatprep.subr.mxu0 0.0
    %v323 = vand.u32 %v49, 4294901760
    %v324 = vsub.f32 %v49, %v323
    %325 = vmatpush1.msra.mxu0 %v324
    %326 = vmatprep.subr.mxu0 0.0
    %v327 = vand.u32 %v50, 4294901760
    %v328 = vsub.f32 %v50, %v327
    %329 = vmatpush1.msra.mxu0 %v328
    %330 = vmatprep.subr.mxu0 0.0
    %v331 = vand.u32 %v51, 4294901760
    %v332 = vsub.f32 %v51, %v331
    %333 = vmatpush1.msra.mxu0 %v332
    %334 = vmatprep.subr.mxu0 0.0
    %v335 = vand.u32 %v52, 4294901760
    %v336 = vsub.f32 %v52, %v335
    %337 = vmatpush1.msra.mxu0 %v336
    %338 = vmatprep.subr.mxu0 0.0
    %v339 = vand.u32 %v53, 4294901760
    %v340 = vsub.f32 %v53, %v339
    %341 = vmatpush1.msra.mxu0 %v340
    %342 = vmatprep.subr.mxu0 0.0
    %v343 = vand.u32 %v54, 4294901760
    %v344 = vsub.f32 %v54, %v343
    %345 = vmatpush1.msra.mxu0 %v344
    %346 = vmatprep.subr.mxu0 0.0
    %v347 = vand.u32 %v55, 4294901760
    %v348 = vsub.f32 %v55, %v347
    %349 = vmatpush1.msra.mxu0 %v348
    %350 = vmatprep.subr.mxu0 0.0
    %v351 = vand.u32 %v56, 4294901760
    %v352 = vsub.f32 %v56, %v351
    %353 = vmatpush1.msra.mxu0 %v352
    %354 = vmatprep.subr.mxu0 0.0
    %v355 = vand.u32 %v57, 4294901760
    %v356 = vsub.f32 %v57, %v355
    %357 = vmatpush1.msra.mxu0 %v356
    %358 = vmatprep.subr.mxu0 0.0
    %v359 = vand.u32 %v58, 4294901760
    %v360 = vsub.f32 %v58, %v359
    %361 = vmatpush1.msra.mxu0 %v360
    %362 = vmatprep.subr.mxu0 0.0
    %v363 = vand.u32 %v59, 4294901760
    %v364 = vsub.f32 %v59, %v363
    %365 = vmatpush1.msra.mxu0 %v364
    %366 = vmatprep.subr.mxu0 0.0
    %367 = vmatpush1.msra.mxu0 0.0
    %368 = vmatprep.subr.mxu0 0.0
    %369 = vmatpush1.msra.mxu0 0.0
    %370 = vmatprep.subr.mxu0 0.0
    %371 = vmatpush1.msra.mxu0 0.0
    %372 = vmatprep.subr.mxu0 0.0
    %373 = vmatpush1.msra.mxu0 0.0
    %374 = vmatprep.subr.mxu0 0.0
    %375 = vmatpush1.msra.mxu0 0.0
    %376 = vmatprep.subr.mxu0 0.0
    %377 = vmatpush1.msra.mxu0 0.0
    %378 = vmatprep.subr.mxu0 0.0
    %379 = vmatpush1.msra.mxu0 0.0
    %380 = vmatprep.subr.mxu0 0.0
    %381 = vmatpush1.msra.mxu0 0.0
    %382 = vmatprep.subr.mxu0 0.0
    %383 = vmatpush1.msra.mxu0 0.0
    %384 = vmatprep.subr.mxu0 0.0
    %385 = vmatpush1.msra.mxu0 0.0
    %386 = vmatprep.subr.mxu0 0.0
    %387 = vmatpush1.msra.mxu0 0.0
    %388 = vmatprep.subr.mxu0 0.0
    %389 = vmatpush1.msra.mxu0 0.0
    %390 = vmatprep.subr.mxu0 0.0
    %391 = vmatpush1.msra.mxu0 0.0
    %392 = vmatprep.subr.mxu0 0.0
    %393 = vmatpush1.msra.mxu0 0.0
    %394 = vmatprep.subr.mxu0 0.0
    %395 = vmatpush1.msra.mxu0 0.0
    %396 = vmatprep.subr.mxu0 0.0
    %397 = vmatpush1.msra.mxu0 0.0
    %398 = vmatprep.mubr.f32.mxu0 0.0
    %v399 = vand.u32 %v40, 4294901760
    %v400 = vsub.f32 %v40, %v399
    %401 = vmatmul.mubr.f32.gmra.mrb[0].mxu0 %v400
    %v402 = vpop.f32.mrb[0].mxu0
    %v403 = vadd.f32 %v299, %v402
    %v404 = vpop.f32.mrb[0].mxu0
    %405 = vdwg.mxu0
    %406 = vmatprep.subr.mxu0 0.0
    %v407 = vand.u32 %v44, 4294901760
    %408 = vmatpush1.msra.mxu0 %v407
    %409 = vmatprep.subr.mxu0 0.0
    %v410 = vand.u32 %v45, 4294901760
    %411 = vmatpush1.msra.mxu0 %v410
    %412 = vmatprep.subr.mxu0 0.0
    %v413 = vand.u32 %v46, 4294901760
    %414 = vmatpush1.msra.mxu0 %v413
    %415 = vmatprep.subr.mxu0 0.0
    %v416 = vand.u32 %v47, 4294901760
    %417 = vmatpush1.msra.mxu0 %v416
    %418 = vmatprep.subr.mxu0 0.0
    %v419 = vand.u32 %v48, 4294901760
    %420 = vmatpush1.msra.mxu0 %v419
    %421 = vmatprep.subr.mxu0 0.0
    %v422 = vand.u32 %v49, 4294901760
    %423 = vmatpush1.msra.mxu0 %v422
    %424 = vmatprep.subr.mxu0 0.0
    %v425 = vand.u32 %v50, 4294901760
    %426 = vmatpush1.msra.mxu0 %v425
    %427 = vmatprep.subr.mxu0 0.0
    %v428 = vand.u32 %v51, 4294901760
    %429 = vmatpush1.msra.mxu0 %v428
    %430 = vmatprep.subr.mxu0 0.0
    %v431 = vand.u32 %v52, 4294901760
    %432 = vmatpush1.msra.mxu0 %v431
    %433 = vmatprep.subr.mxu0 0.0
    %v434 = vand.u32 %v53, 4294901760
    %435 = vmatpush1.msra.mxu0 %v434
    %436 = vmatprep.subr.mxu0 0.0
    %v437 = vand.u32 %v54, 4294901760
    %438 = vmatpush1.msra.mxu0 %v437
    %439 = vmatprep.subr.mxu0 0.0
    %v440 = vand.u32 %v55, 4294901760
    %441 = vmatpush1.msra.mxu0 %v440
    %442 = vmatprep.subr.mxu0 0.0
    %v443 = vand.u32 %v56, 4294901760
    %444 = vmatpush1.msra.mxu0 %v443
    %445 = vmatprep.subr.mxu0 0.0
    %v446 = vand.u32 %v57, 4294901760
    %447 = vmatpush1.msra.mxu0 %v446
    %448 = vmatprep.subr.mxu0 0.0
    %v449 = vand.u32 %v58, 4294901760
    %450 = vmatpush1.msra.mxu0 %v449
    %451 = vmatprep.subr.mxu0 0.0
    %v452 = vand.u32 %v59, 4294901760
    %453 = vmatpush1.msra.mxu0 %v452
    %454 = vmatprep.subr.mxu0 0.0
    %455 = vmatpush1.msra.mxu0 0.0
    %456 = vmatprep.subr.mxu0 0.0
    %457 = vmatpush1.msra.mxu0 0.0
    %458 = vmatprep.subr.mxu0 0.0
    %459 = vmatpush1.msra.mxu0 0.0
    %460 = vmatprep.subr.mxu0 0.0
    %461 = vmatpush1.msra.mxu0 0.0
    %462 = vmatprep.subr.mxu0 0.0
    %463 = vmatpush1.msra.mxu0 0.0
    %464 = vmatprep.subr.mxu0 0.0
    %465 = vmatpush1.msra.mxu0 0.0
    %466 = vmatprep.subr.mxu0 0.0
    %467 = vmatpush1.msra.mxu0 0.0
    %468 = vmatprep.subr.mxu0 0.0
    %469 = vmatpush1.msra.mxu0 0.0
    %470 = vmatprep.subr.mxu0 0.0
    %471 = vmatpush1.msra.mxu0 0.0
    %472 = vmatprep.subr.mxu0 0.0
    %473 = vmatpush1.msra.mxu0 0.0
    %474 = vmatprep.subr.mxu0 0.0
    %475 = vmatpush1.msra.mxu0 0.0
    %476 = vmatprep.subr.mxu0 0.0
    %477 = vmatpush1.msra.mxu0 0.0
    %478 = vmatprep.subr.mxu0 0.0
    %479 = vmatpush1.msra.mxu0 0.0
    %480 = vmatprep.subr.mxu0 0.0
    %481 = vmatpush1.msra.mxu0 0.0
    %482 = vmatprep.subr.mxu0 0.0
    %483 = vmatpush1.msra.mxu0 0.0
    %484 = vmatprep.subr.mxu0 0.0
    %485 = vmatpush1.msra.mxu0 0.0
    %486 = vmatprep.mubr.f32.mxu0 0.0
    %v487 = vand.u32 %v40, 4294901760
    %v488 = vsub.f32 %v40, %v487
    %v489 = vand.u32 %v488, 4294901760
    %490 = vmatmul.mubr.f32.gmra.mrb[0].mxu0 %v489
    %v491 = vpop.f32.mrb[0].mxu0
    %v492 = vadd.f32 %v403, %v491
    %v493 = vpop.f32.mrb[0].mxu0
    %494 = vdwg.mxu0
    %495 = vmatprep.subr.mxu0 0.0
    %v496 = vand.u32 %v44, 4294901760
    %v497 = vsub.f32 %v44, %v496
    %v498 = vand.u32 %v497, 4294901760
    %499 = vmatpush1.msra.mxu0 %v498
    %500 = vmatprep.subr.mxu0 0.0
    %v501 = vand.u32 %v45, 4294901760
    %v502 = vsub.f32 %v45, %v501
    %v503 = vand.u32 %v502, 4294901760
    %504 = vmatpush1.msra.mxu0 %v503
    %505 = vmatprep.subr.mxu0 0.0
    %v506 = vand.u32 %v46, 4294901760
    %v507 = vsub.f32 %v46, %v506
    %v508 = vand.u32 %v507, 4294901760
    %509 = vmatpush1.msra.mxu0 %v508
    %510 = vmatprep.subr.mxu0 0.0
    %v511 = vand.u32 %v47, 4294901760
    %v512 = vsub.f32 %v47, %v511
    %v513 = vand.u32 %v512, 4294901760
    %514 = vmatpush1.msra.mxu0 %v513
    %515 = vmatprep.subr.mxu0 0.0
    %v516 = vand.u32 %v48, 4294901760
    %v517 = vsub.f32 %v48, %v516
    %v518 = vand.u32 %v517, 4294901760
    %519 = vmatpush1.msra.mxu0 %v518
    %520 = vmatprep.subr.mxu0 0.0
    %v521 = vand.u32 %v49, 4294901760
    %v522 = vsub.f32 %v49, %v521
    %v523 = vand.u32 %v522, 4294901760
    %524 = vmatpush1.msra.mxu0 %v523
    %525 = vmatprep.subr.mxu0 0.0
    %v526 = vand.u32 %v50, 4294901760
    %v527 = vsub.f32 %v50, %v526
    %v528 = vand.u32 %v527, 4294901760
    %529 = vmatpush1.msra.mxu0 %v528
    %530 = vmatprep.subr.mxu0 0.0
    %v531 = vand.u32 %v51, 4294901760
    %v532 = vsub.f32 %v51, %v531
    %v533 = vand.u32 %v532, 4294901760
    %534 = vmatpush1.msra.mxu0 %v533
    %535 = vmatprep.subr.mxu0 0.0
    %v536 = vand.u32 %v52, 4294901760
    %v537 = vsub.f32 %v52, %v536
    %v538 = vand.u32 %v537, 4294901760
    %539 = vmatpush1.msra.mxu0 %v538
    %540 = vmatprep.subr.mxu0 0.0
    %v541 = vand.u32 %v53, 4294901760
    %v542 = vsub.f32 %v53, %v541
    %v543 = vand.u32 %v542, 4294901760
    %544 = vmatpush1.msra.mxu0 %v543
    %545 = vmatprep.subr.mxu0 0.0
    %v546 = vand.u32 %v54, 4294901760
    %v547 = vsub.f32 %v54, %v546
    %v548 = vand.u32 %v547, 4294901760
    %549 = vmatpush1.msra.mxu0 %v548
    %550 = vmatprep.subr.mxu0 0.0
    %v551 = vand.u32 %v55, 4294901760
    %v552 = vsub.f32 %v55, %v551
    %v553 = vand.u32 %v552, 4294901760
    %554 = vmatpush1.msra.mxu0 %v553
    %555 = vmatprep.subr.mxu0 0.0
    %v556 = vand.u32 %v56, 4294901760
    %v557 = vsub.f32 %v56, %v556
    %v558 = vand.u32 %v557, 4294901760
    %559 = vmatpush1.msra.mxu0 %v558
    %560 = vmatprep.subr.mxu0 0.0
    %v561 = vand.u32 %v57, 4294901760
    %v562 = vsub.f32 %v57, %v561
    %v563 = vand.u32 %v562, 4294901760
    %564 = vmatpush1.msra.mxu0 %v563
    %565 = vmatprep.subr.mxu0 0.0
    %v566 = vand.u32 %v58, 4294901760
    %v567 = vsub.f32 %v58, %v566
    %v568 = vand.u32 %v567, 4294901760
    %569 = vmatpush1.msra.mxu0 %v568
    %570 = vmatprep.subr.mxu0 0.0
    %v571 = vand.u32 %v59, 4294901760
    %v572 = vsub.f32 %v59, %v571
    %v573 = vand.u32 %v572, 4294901760
    %574 = vmatpush1.msra.mxu0 %v573
    %575 = vmatprep.subr.mxu0 0.0
    %576 = vmatpush1.msra.mxu0 0.0
    %577 = vmatprep.subr.mxu0 0.0
    %578 = vmatpush1.msra.mxu0 0.0
    %579 = vmatprep.subr.mxu0 0.0
    %580 = vmatpush1.msra.mxu0 0.0
    %581 = vmatprep.subr.mxu0 0.0
    %582 = vmatpush1.msra.mxu0 0.0
    %583 = vmatprep.subr.mxu0 0.0
    %584 = vmatpush1.msra.mxu0 0.0
    %585 = vmatprep.subr.mxu0 0.0
    %586 = vmatpush1.msra.mxu0 0.0
    %587 = vmatprep.subr.mxu0 0.0
    %588 = vmatpush1.msra.mxu0 0.0
    %589 = vmatprep.subr.mxu0 0.0
    %590 = vmatpush1.msra.mxu0 0.0
    %591 = vmatprep.subr.mxu0 0.0
    %592 = vmatpush1.msra.mxu0 0.0
    %593 = vmatprep.subr.mxu0 0.0
    %594 = vmatpush1.msra.mxu0 0.0
    %595 = vmatprep.subr.mxu0 0.0
    %596 = vmatpush1.msra.mxu0 0.0
    %597 = vmatprep.subr.mxu0 0.0
    %598 = vmatpush1.msra.mxu0 0.0
    %599 = vmatprep.subr.mxu0 0.0
    %600 = vmatpush1.msra.mxu0 0.0
    %601 = vmatprep.subr.mxu0 0.0
    %602 = vmatpush1.msra.mxu0 0.0
    %603 = vmatprep.subr.mxu0 0.0
    %604 = vmatpush1.msra.mxu0 0.0
    %605 = vmatprep.subr.mxu0 0.0
    %606 = vmatpush1.msra.mxu0 0.0
    %607 = vmatprep.mubr.f32.mxu0 0.0
    %v608 = vand.u32 %v40, 4294901760
    %609 = vmatmul.mubr.f32.gmra.mrb[0].mxu0 %v608
    %v610 = vpop.f32.mrb[0].mxu0
    %v611 = vadd.f32 %v492, %v610
    %v612 = vpop.f32.mrb[0].mxu0
    %613 = vdwg.mxu0
    %614 = vmatprep.subr.mxu0 0.0
    %v615 = vand.u32 %v44, 4294901760
    %616 = vmatpush1.msra.mxu0 %v615
    %617 = vmatprep.subr.mxu0 0.0
    %v618 = vand.u32 %v45, 4294901760
    %619 = vmatpush1.msra.mxu0 %v618
    %620 = vmatprep.subr.mxu0 0.0
    %v621 = vand.u32 %v46, 4294901760
    %622 = vmatpush1.msra.mxu0 %v621
    %623 = vmatprep.subr.mxu0 0.0
    %v624 = vand.u32 %v47, 4294901760
    %625 = vmatpush1.msra.mxu0 %v624
    %626 = vmatprep.subr.mxu0 0.0
    %v627 = vand.u32 %v48, 4294901760
    %628 = vmatpush1.msra.mxu0 %v627
    %629 = vmatprep.subr.mxu0 0.0
    %v630 = vand.u32 %v49, 4294901760
    %631 = vmatpush1.msra.mxu0 %v630
    %632 = vmatprep.subr.mxu0 0.0
    %v633 = vand.u32 %v50, 4294901760
    %634 = vmatpush1.msra.mxu0 %v633
    %635 = vmatprep.subr.mxu0 0.0
    %v636 = vand.u32 %v51, 4294901760
    %637 = vmatpush1.msra.mxu0 %v636
    %638 = vmatprep.subr.mxu0 0.0
    %v639 = vand.u32 %v52, 4294901760
    %640 = vmatpush1.msra.mxu0 %v639
    %641 = vmatprep.subr.mxu0 0.0
    %v642 = vand.u32 %v53, 4294901760
    %643 = vmatpush1.msra.mxu0 %v642
    %644 = vmatprep.subr.mxu0 0.0
    %v645 = vand.u32 %v54, 4294901760
    %646 = vmatpush1.msra.mxu0 %v645
    %647 = vmatprep.subr.mxu0 0.0
    %v648 = vand.u32 %v55, 4294901760
    %649 = vmatpush1.msra.mxu0 %v648
    %650 = vmatprep.subr.mxu0 0.0
    %v651 = vand.u32 %v56, 4294901760
    %652 = vmatpush1.msra.mxu0 %v651
    %653 = vmatprep.subr.mxu0 0.0
    %v654 = vand.u32 %v57, 4294901760
    %655 = vmatpush1.msra.mxu0 %v654
    %656 = vmatprep.subr.mxu0 0.0
    %v657 = vand.u32 %v58, 4294901760
    %658 = vmatpush1.msra.mxu0 %v657
    %659 = vmatprep.subr.mxu0 0.0
    %v660 = vand.u32 %v59, 4294901760
    %661 = vmatpush1.msra.mxu0 %v660
    %662 = vmatprep.subr.mxu0 0.0
    %663 = vmatpush1.msra.mxu0 0.0
    %664 = vmatprep.subr.mxu0 0.0
    %665 = vmatpush1.msra.mxu0 0.0
    %666 = vmatprep.subr.mxu0 0.0
    %667 = vmatpush1.msra.mxu0 0.0
    %668 = vmatprep.subr.mxu0 0.0
    %669 = vmatpush1.msra.mxu0 0.0
    %670 = vmatprep.subr.mxu0 0.0
    %671 = vmatpush1.msra.mxu0 0.0
    %672 = vmatprep.subr.mxu0 0.0
    %673 = vmatpush1.msra.mxu0 0.0
    %674 = vmatprep.subr.mxu0 0.0
    %675 = vmatpush1.msra.mxu0 0.0
    %676 = vmatprep.subr.mxu0 0.0
    %677 = vmatpush1.msra.mxu0 0.0
    %678 = vmatprep.subr.mxu0 0.0
    %679 = vmatpush1.msra.mxu0 0.0
    %680 = vmatprep.subr.mxu0 0.0
    %681 = vmatpush1.msra.mxu0 0.0
    %682 = vmatprep.subr.mxu0 0.0
    %683 = vmatpush1.msra.mxu0 0.0
    %684 = vmatprep.subr.mxu0 0.0
    %685 = vmatpush1.msra.mxu0 0.0
    %686 = vmatprep.subr.mxu0 0.0
    %687 = vmatpush1.msra.mxu0 0.0
    %688 = vmatprep.subr.mxu0 0.0
    %689 = vmatpush1.msra.mxu0 0.0
    %690 = vmatprep.subr.mxu0 0.0
    %691 = vmatpush1.msra.mxu0 0.0
    %692 = vmatprep.subr.mxu0 0.0
    %693 = vmatpush1.msra.mxu0 0.0
    %694 = vmatprep.mubr.f32.mxu0 0.0
    %v695 = vand.u32 %v40, 4294901760
    %696 = vmatmul.mubr.f32.gmra.mrb[0].mxu0 %v695
    %v697 = vpop.f32.mrb[0].mxu0
    %v698 = vadd.f32 %v611, %v697
    %v699 = vpop.f32.mrb[0].mxu0
    %700 = vdwg.mxu0
    %vm701 = vcmask 80896
    %v703 = vsel %vm701, %v41, 0
    %vm705 = vcmask 1041408
    %v707 = vsel %vm705, %v43, 0
    %709 = vmatprep.subr.mxu0 0.0
    %v710 = vand.u32 %v42, 4294901760
    %711 = vmatpush1.msra.mxu0 %v710
    %712 = vmatprep.subr.mxu0 0.0
    %v713 = vand.u32 %v707, 4294901760
    %714 = vmatpush1.msra.mxu0 %v713
    %715 = vmatprep.subr.mxu0 0.0
    %716 = vmatpush1.msra.mxu0 0.0
    %717 = vmatprep.subr.mxu0 0.0
    %718 = vmatpush1.msra.mxu0 0.0
    %719 = vmatprep.subr.mxu0 0.0
    %720 = vmatpush1.msra.mxu0 0.0
    %721 = vmatprep.subr.mxu0 0.0
    %722 = vmatpush1.msra.mxu0 0.0
    %723 = vmatprep.subr.mxu0 0.0
    %724 = vmatpush1.msra.mxu0 0.0
    %725 = vmatprep.subr.mxu0 0.0
    %726 = vmatpush1.msra.mxu0 0.0
    %727 = vmatprep.subr.mxu0 0.0
    %728 = vmatpush1.msra.mxu0 0.0
    %729 = vmatprep.subr.mxu0 0.0
    %730 = vmatpush1.msra.mxu0 0.0
    %731 = vmatprep.subr.mxu0 0.0
    %732 = vmatpush1.msra.mxu0 0.0
    %733 = vmatprep.subr.mxu0 0.0
    %734 = vmatpush1.msra.mxu0 0.0
    %735 = vmatprep.subr.mxu0 0.0
    %736 = vmatpush1.msra.mxu0 0.0
    %737 = vmatprep.subr.mxu0 0.0
    %738 = vmatpush1.msra.mxu0 0.0
    %739 = vmatprep.subr.mxu0 0.0
    %740 = vmatpush1.msra.mxu0 0.0
    %741 = vmatprep.subr.mxu0 0.0
    %742 = vmatpush1.msra.mxu0 0.0
    %743 = vmatprep.subr.mxu0 0.0
    %744 = vmatpush1.msra.mxu0 0.0
    %745 = vmatprep.subr.mxu0 0.0
    %746 = vmatpush1.msra.mxu0 0.0
    %747 = vmatprep.subr.mxu0 0.0
    %748 = vmatpush1.msra.mxu0 0.0
    %749 = vmatprep.subr.mxu0 0.0
    %750 = vmatpush1.msra.mxu0 0.0
    %751 = vmatprep.subr.mxu0 0.0
    %752 = vmatpush1.msra.mxu0 0.0
    %753 = vmatprep.subr.mxu0 0.0
    %754 = vmatpush1.msra.mxu0 0.0
    %755 = vmatprep.subr.mxu0 0.0
    %756 = vmatpush1.msra.mxu0 0.0
    %757 = vmatprep.subr.mxu0 0.0
    %758 = vmatpush1.msra.mxu0 0.0
    %759 = vmatprep.subr.mxu0 0.0
    %760 = vmatpush1.msra.mxu0 0.0
    %761 = vmatprep.subr.mxu0 0.0
    %762 = vmatpush1.msra.mxu0 0.0
    %763 = vmatprep.subr.mxu0 0.0
    %764 = vmatpush1.msra.mxu0 0.0
    %765 = vmatprep.subr.mxu0 0.0
    %766 = vmatpush1.msra.mxu0 0.0
    %767 = vmatprep.subr.mxu0 0.0
    %768 = vmatpush1.msra.mxu0 0.0
    %769 = vmatprep.subr.mxu0 0.0
    %770 = vmatpush1.msra.mxu0 0.0
    %771 = vmatprep.subr.mxu0 0.0
    %772 = vmatpush1.msra.mxu0 0.0
    %773 = vmatprep.subr.mxu0 0.0
    %774 = vmatpush1.msra.mxu0 0.0
    %775 = vmatprep.mubr.f32.mxu0 0.0
    %v776 = vand.u32 %v703, 4294901760
    %v777 = vsub.f32 %v703, %v776
    %v778 = vand.u32 %v777, 4294901760
    %v779 = vsub.f32 %v777, %v778
    %v780 = vand.u32 %v779, 4294901760
    %781 = vmatmul.mubr.f32.gmra.mrb[0].mxu0 %v780
    %v782 = vpop.f32.mrb[0].mxu0
    %v783 = vadd.f32 %v698, %v782
    %v784 = vpop.f32.mrb[0].mxu0
    %785 = vdwg.mxu0
    %786 = vmatprep.subr.mxu0 0.0
    %v787 = vand.u32 %v42, 4294901760
    %v788 = vsub.f32 %v42, %v787
    %v789 = vand.u32 %v788, 4294901760
    %v790 = vsub.f32 %v788, %v789
    %v791 = vand.u32 %v790, 4294901760
    %792 = vmatpush1.msra.mxu0 %v791
    %793 = vmatprep.subr.mxu0 0.0
    %v794 = vand.u32 %v707, 4294901760
    %v795 = vsub.f32 %v707, %v794
    %v796 = vand.u32 %v795, 4294901760
    %v797 = vsub.f32 %v795, %v796
    %v798 = vand.u32 %v797, 4294901760
    %799 = vmatpush1.msra.mxu0 %v798
    %800 = vmatprep.subr.mxu0 0.0
    %801 = vmatpush1.msra.mxu0 0.0
    %802 = vmatprep.subr.mxu0 0.0
    %803 = vmatpush1.msra.mxu0 0.0
    %804 = vmatprep.subr.mxu0 0.0
    %805 = vmatpush1.msra.mxu0 0.0
    %806 = vmatprep.subr.mxu0 0.0
    %807 = vmatpush1.msra.mxu0 0.0
    %808 = vmatprep.subr.mxu0 0.0
    %809 = vmatpush1.msra.mxu0 0.0
    %810 = vmatprep.subr.mxu0 0.0
    %811 = vmatpush1.msra.mxu0 0.0
    %812 = vmatprep.subr.mxu0 0.0
    %813 = vmatpush1.msra.mxu0 0.0
    %814 = vmatprep.subr.mxu0 0.0
    %815 = vmatpush1.msra.mxu0 0.0
    %816 = vmatprep.subr.mxu0 0.0
    %817 = vmatpush1.msra.mxu0 0.0
    %818 = vmatprep.subr.mxu0 0.0
    %819 = vmatpush1.msra.mxu0 0.0
    %820 = vmatprep.subr.mxu0 0.0
    %821 = vmatpush1.msra.mxu0 0.0
    %822 = vmatprep.subr.mxu0 0.0
    %823 = vmatpush1.msra.mxu0 0.0
    %824 = vmatprep.subr.mxu0 0.0
    %825 = vmatpush1.msra.mxu0 0.0
    %826 = vmatprep.subr.mxu0 0.0
    %827 = vmatpush1.msra.mxu0 0.0
    %828 = vmatprep.subr.mxu0 0.0
    %829 = vmatpush1.msra.mxu0 0.0
    %830 = vmatprep.subr.mxu0 0.0
    %831 = vmatpush1.msra.mxu0 0.0
    %832 = vmatprep.subr.mxu0 0.0
    %833 = vmatpush1.msra.mxu0 0.0
    %834 = vmatprep.subr.mxu0 0.0
    %835 = vmatpush1.msra.mxu0 0.0
    %836 = vmatprep.subr.mxu0 0.0
    %837 = vmatpush1.msra.mxu0 0.0
    %838 = vmatprep.subr.mxu0 0.0
    %839 = vmatpush1.msra.mxu0 0.0
    %840 = vmatprep.subr.mxu0 0.0
    %841 = vmatpush1.msra.mxu0 0.0
    %842 = vmatprep.subr.mxu0 0.0
    %843 = vmatpush1.msra.mxu0 0.0
    %844 = vmatprep.subr.mxu0 0.0
    %845 = vmatpush1.msra.mxu0 0.0
    %846 = vmatprep.subr.mxu0 0.0
    %847 = vmatpush1.msra.mxu0 0.0
    %848 = vmatprep.subr.mxu0 0.0
    %849 = vmatpush1.msra.mxu0 0.0
    %850 = vmatprep.subr.mxu0 0.0
    %851 = vmatpush1.msra.mxu0 0.0
    %852 = vmatprep.subr.mxu0 0.0
    %853 = vmatpush1.msra.mxu0 0.0
    %854 = vmatprep.subr.mxu0 0.0
    %855 = vmatpush1.msra.mxu0 0.0
    %856 = vmatprep.subr.mxu0 0.0
    %857 = vmatpush1.msra.mxu0 0.0
    %858 = vmatprep.subr.mxu0 0.0
    %859 = vmatpush1.msra.mxu0 0.0
    %860 = vmatprep.mubr.f32.mxu0 0.0
    %v861 = vand.u32 %v703, 4294901760
    %862 = vmatmul.mubr.f32.gmra.mrb[0].mxu0 %v861
    %v863 = vpop.f32.mrb[0].mxu0
    %v864 = vadd.f32 %v783, %v863
    %v865 = vpop.f32.mrb[0].mxu0
    %866 = vdwg.mxu0
    %867 = vmatprep.subr.mxu0 0.0
    %v868 = vand.u32 %v42, 4294901760
    %v869 = vsub.f32 %v42, %v868
    %870 = vmatpush1.msra.mxu0 %v869
    %871 = vmatprep.subr.mxu0 0.0
    %v872 = vand.u32 %v707, 4294901760
    %v873 = vsub.f32 %v707, %v872
    %874 = vmatpush1.msra.mxu0 %v873
    %875 = vmatprep.subr.mxu0 0.0
    %876 = vmatpush1.msra.mxu0 0.0
    %877 = vmatprep.subr.mxu0 0.0
    %878 = vmatpush1.msra.mxu0 0.0
    %879 = vmatprep.subr.mxu0 0.0
    %880 = vmatpush1.msra.mxu0 0.0
    %881 = vmatprep.subr.mxu0 0.0
    %882 = vmatpush1.msra.mxu0 0.0
    %883 = vmatprep.subr.mxu0 0.0
    %884 = vmatpush1.msra.mxu0 0.0
    %885 = vmatprep.subr.mxu0 0.0
    %886 = vmatpush1.msra.mxu0 0.0
    %887 = vmatprep.subr.mxu0 0.0
    %888 = vmatpush1.msra.mxu0 0.0
    %889 = vmatprep.subr.mxu0 0.0
    %890 = vmatpush1.msra.mxu0 0.0
    %891 = vmatprep.subr.mxu0 0.0
    %892 = vmatpush1.msra.mxu0 0.0
    %893 = vmatprep.subr.mxu0 0.0
    %894 = vmatpush1.msra.mxu0 0.0
    %895 = vmatprep.subr.mxu0 0.0
    %896 = vmatpush1.msra.mxu0 0.0
    %897 = vmatprep.subr.mxu0 0.0
    %898 = vmatpush1.msra.mxu0 0.0
    %899 = vmatprep.subr.mxu0 0.0
    %900 = vmatpush1.msra.mxu0 0.0
    %901 = vmatprep.subr.mxu0 0.0
    %902 = vmatpush1.msra.mxu0 0.0
    %903 = vmatprep.subr.mxu0 0.0
    %904 = vmatpush1.msra.mxu0 0.0
    %905 = vmatprep.subr.mxu0 0.0
    %906 = vmatpush1.msra.mxu0 0.0
    %907 = vmatprep.subr.mxu0 0.0
    %908 = vmatpush1.msra.mxu0 0.0
    %909 = vmatprep.subr.mxu0 0.0
    %910 = vmatpush1.msra.mxu0 0.0
    %911 = vmatprep.subr.mxu0 0.0
    %912 = vmatpush1.msra.mxu0 0.0
    %913 = vmatprep.subr.mxu0 0.0
    %914 = vmatpush1.msra.mxu0 0.0
    %915 = vmatprep.subr.mxu0 0.0
    %916 = vmatpush1.msra.mxu0 0.0
    %917 = vmatprep.subr.mxu0 0.0
    %918 = vmatpush1.msra.mxu0 0.0
    %919 = vmatprep.subr.mxu0 0.0
    %920 = vmatpush1.msra.mxu0 0.0
    %921 = vmatprep.subr.mxu0 0.0
    %922 = vmatpush1.msra.mxu0 0.0
    %923 = vmatprep.subr.mxu0 0.0
    %924 = vmatpush1.msra.mxu0 0.0
    %925 = vmatprep.subr.mxu0 0.0
    %926 = vmatpush1.msra.mxu0 0.0
    %927 = vmatprep.subr.mxu0 0.0
    %928 = vmatpush1.msra.mxu0 0.0
    %929 = vmatprep.subr.mxu0 0.0
    %930 = vmatpush1.msra.mxu0 0.0
    %931 = vmatprep.subr.mxu0 0.0
    %932 = vmatpush1.msra.mxu0 0.0
    %933 = vmatprep.subr.mxu0 0.0
    %934 = vmatpush1.msra.mxu0 0.0
    %935 = vmatprep.mubr.f32.mxu0 0.0
    %v936 = vand.u32 %v703, 4294901760
    %v937 = vsub.f32 %v703, %v936
    %938 = vmatmul.mubr.f32.gmra.mrb[0].mxu0 %v937
    %v939 = vpop.f32.mrb[0].mxu0
    %v940 = vadd.f32 %v864, %v939
    %v941 = vpop.f32.mrb[0].mxu0
    %942 = vdwg.mxu0
    %943 = vmatprep.subr.mxu0 0.0
    %v944 = vand.u32 %v42, 4294901760
    %945 = vmatpush1.msra.mxu0 %v944
    %946 = vmatprep.subr.mxu0 0.0
    %v947 = vand.u32 %v707, 4294901760
    %948 = vmatpush1.msra.mxu0 %v947
    %949 = vmatprep.subr.mxu0 0.0
    %950 = vmatpush1.msra.mxu0 0.0
    %951 = vmatprep.subr.mxu0 0.0
    %952 = vmatpush1.msra.mxu0 0.0
    %953 = vmatprep.subr.mxu0 0.0
    %954 = vmatpush1.msra.mxu0 0.0
    %955 = vmatprep.subr.mxu0 0.0
    %956 = vmatpush1.msra.mxu0 0.0
    %957 = vmatprep.subr.mxu0 0.0
    %958 = vmatpush1.msra.mxu0 0.0
    %959 = vmatprep.subr.mxu0 0.0
    %960 = vmatpush1.msra.mxu0 0.0
    %961 = vmatprep.subr.mxu0 0.0
    %962 = vmatpush1.msra.mxu0 0.0
    %963 = vmatprep.subr.mxu0 0.0
    %964 = vmatpush1.msra.mxu0 0.0
    %965 = vmatprep.subr.mxu0 0.0
    %966 = vmatpush1.msra.mxu0 0.0
    %967 = vmatprep.subr.mxu0 0.0
    %968 = vmatpush1.msra.mxu0 0.0
    %969 = vmatprep.subr.mxu0 0.0
    %970 = vmatpush1.msra.mxu0 0.0
    %971 = vmatprep.subr.mxu0 0.0
    %972 = vmatpush1.msra.mxu0 0.0
    %973 = vmatprep.subr.mxu0 0.0
    %974 = vmatpush1.msra.mxu0 0.0
    %975 = vmatprep.subr.mxu0 0.0
    %976 = vmatpush1.msra.mxu0 0.0
    %977 = vmatprep.subr.mxu0 0.0
    %978 = vmatpush1.msra.mxu0 0.0
    %979 = vmatprep.subr.mxu0 0.0
    %980 = vmatpush1.msra.mxu0 0.0
    %981 = vmatprep.subr.mxu0 0.0
    %982 = vmatpush1.msra.mxu0 0.0
    %983 = vmatprep.subr.mxu0 0.0
    %984 = vmatpush1.msra.mxu0 0.0
    %985 = vmatprep.subr.mxu0 0.0
    %986 = vmatpush1.msra.mxu0 0.0
    %987 = vmatprep.subr.mxu0 0.0
    %988 = vmatpush1.msra.mxu0 0.0
    %989 = vmatprep.subr.mxu0 0.0
    %990 = vmatpush1.msra.mxu0 0.0
    %991 = vmatprep.subr.mxu0 0.0
    %992 = vmatpush1.msra.mxu0 0.0
    %993 = vmatprep.subr.mxu0 0.0
    %994 = vmatpush1.msra.mxu0 0.0
    %995 = vmatprep.subr.mxu0 0.0
    %996 = vmatpush1.msra.mxu0 0.0
    %997 = vmatprep.subr.mxu0 0.0
    %998 = vmatpush1.msra.mxu0 0.0
    %999 = vmatprep.subr.mxu0 0.0
    %1000 = vmatpush1.msra.mxu0 0.0
    %1001 = vmatprep.subr.mxu0 0.0
    %1002 = vmatpush1.msra.mxu0 0.0
    %1003 = vmatprep.subr.mxu0 0.0
    %1004 = vmatpush1.msra.mxu0 0.0
    %1005 = vmatprep.subr.mxu0 0.0
    %1006 = vmatpush1.msra.mxu0 0.0
    %1007 = vmatprep.subr.mxu0 0.0
    %1008 = vmatpush1.msra.mxu0 0.0
    %1009 = vmatprep.mubr.f32.mxu0 0.0
    %v1010 = vand.u32 %v703, 4294901760
    %v1011 = vsub.f32 %v703, %v1010
    %v1012 = vand.u32 %v1011, 4294901760
    %1013 = vmatmul.mubr.f32.gmra.mrb[0].mxu0 %v1012
    %v1014 = vpop.f32.mrb[0].mxu0
    %v1015 = vadd.f32 %v940, %v1014
    %v1016 = vpop.f32.mrb[0].mxu0
    %1017 = vdwg.mxu0
    %1018 = vmatprep.subr.mxu0 0.0
    %v1019 = vand.u32 %v42, 4294901760
    %v1020 = vsub.f32 %v42, %v1019
    %v1021 = vand.u32 %v1020, 4294901760
    %1022 = vmatpush1.msra.mxu0 %v1021
    %1023 = vmatprep.subr.mxu0 0.0
    %v1024 = vand.u32 %v707, 4294901760
    %v1025 = vsub.f32 %v707, %v1024
    %v1026 = vand.u32 %v1025, 4294901760
    %1027 = vmatpush1.msra.mxu0 %v1026
    %1028 = vmatprep.subr.mxu0 0.0
    %1029 = vmatpush1.msra.mxu0 0.0
    %1030 = vmatprep.subr.mxu0 0.0
    %1031 = vmatpush1.msra.mxu0 0.0
    %1032 = vmatprep.subr.mxu0 0.0
    %1033 = vmatpush1.msra.mxu0 0.0
    %1034 = vmatprep.subr.mxu0 0.0
    %1035 = vmatpush1.msra.mxu0 0.0
    %1036 = vmatprep.subr.mxu0 0.0
    %1037 = vmatpush1.msra.mxu0 0.0
    %1038 = vmatprep.subr.mxu0 0.0
    %1039 = vmatpush1.msra.mxu0 0.0
    %1040 = vmatprep.subr.mxu0 0.0
    %1041 = vmatpush1.msra.mxu0 0.0
    %1042 = vmatprep.subr.mxu0 0.0
    %1043 = vmatpush1.msra.mxu0 0.0
    %1044 = vmatprep.subr.mxu0 0.0
    %1045 = vmatpush1.msra.mxu0 0.0
    %1046 = vmatprep.subr.mxu0 0.0
    %1047 = vmatpush1.msra.mxu0 0.0
    %1048 = vmatprep.subr.mxu0 0.0
    %1049 = vmatpush1.msra.mxu0 0.0
    %1050 = vmatprep.subr.mxu0 0.0
    %1051 = vmatpush1.msra.mxu0 0.0
    %1052 = vmatprep.subr.mxu0 0.0
    %1053 = vmatpush1.msra.mxu0 0.0
    %1054 = vmatprep.subr.mxu0 0.0
    %1055 = vmatpush1.msra.mxu0 0.0
    %1056 = vmatprep.subr.mxu0 0.0
    %1057 = vmatpush1.msra.mxu0 0.0
    %1058 = vmatprep.subr.mxu0 0.0
    %1059 = vmatpush1.msra.mxu0 0.0
    %1060 = vmatprep.subr.mxu0 0.0
    %1061 = vmatpush1.msra.mxu0 0.0
    %1062 = vmatprep.subr.mxu0 0.0
    %1063 = vmatpush1.msra.mxu0 0.0
    %1064 = vmatprep.subr.mxu0 0.0
    %1065 = vmatpush1.msra.mxu0 0.0
    %1066 = vmatprep.subr.mxu0 0.0
    %1067 = vmatpush1.msra.mxu0 0.0
    %1068 = vmatprep.subr.mxu0 0.0
    %1069 = vmatpush1.msra.mxu0 0.0
    %1070 = vmatprep.subr.mxu0 0.0
    %1071 = vmatpush1.msra.mxu0 0.0
    %1072 = vmatprep.subr.mxu0 0.0
    %1073 = vmatpush1.msra.mxu0 0.0
    %1074 = vmatprep.subr.mxu0 0.0
    %1075 = vmatpush1.msra.mxu0 0.0
    %1076 = vmatprep.subr.mxu0 0.0
    %1077 = vmatpush1.msra.mxu0 0.0
    %1078 = vmatprep.subr.mxu0 0.0
    %1079 = vmatpush1.msra.mxu0 0.0
    %1080 = vmatprep.subr.mxu0 0.0
    %1081 = vmatpush1.msra.mxu0 0.0
    %1082 = vmatprep.subr.mxu0 0.0
    %1083 = vmatpush1.msra.mxu0 0.0
    %1084 = vmatprep.subr.mxu0 0.0
    %1085 = vmatpush1.msra.mxu0 0.0
    %1086 = vmatprep.subr.mxu0 0.0
    %1087 = vmatpush1.msra.mxu0 0.0
    %1088 = vmatprep.mubr.f32.mxu0 0.0
    %v1089 = vand.u32 %v703, 4294901760
    %1090 = vmatmul.mubr.f32.gmra.mrb[0].mxu0 %v1089
    %v1091 = vpop.f32.mrb[0].mxu0
    %v1092 = vadd.f32 %v1015, %v1091
    %v1093 = vpop.f32.mrb[0].mxu0
    %1094 = vdwg.mxu0
    %1095 = vmatprep.subr.mxu0 0.0
    %v1096 = vand.u32 %v42, 4294901760
    %1097 = vmatpush1.msra.mxu0 %v1096
    %1098 = vmatprep.subr.mxu0 0.0
    %v1099 = vand.u32 %v707, 4294901760
    %1100 = vmatpush1.msra.mxu0 %v1099
    %1101 = vmatprep.subr.mxu0 0.0
    %1102 = vmatpush1.msra.mxu0 0.0
    %1103 = vmatprep.subr.mxu0 0.0
    %1104 = vmatpush1.msra.mxu0 0.0
    %1105 = vmatprep.subr.mxu0 0.0
    %1106 = vmatpush1.msra.mxu0 0.0
    %1107 = vmatprep.subr.mxu0 0.0
    %1108 = vmatpush1.msra.mxu0 0.0
    %1109 = vmatprep.subr.mxu0 0.0
    %1110 = vmatpush1.msra.mxu0 0.0
    %1111 = vmatprep.subr.mxu0 0.0
    %1112 = vmatpush1.msra.mxu0 0.0
    %1113 = vmatprep.subr.mxu0 0.0
    %1114 = vmatpush1.msra.mxu0 0.0
    %1115 = vmatprep.subr.mxu0 0.0
    %1116 = vmatpush1.msra.mxu0 0.0
    %1117 = vmatprep.subr.mxu0 0.0
    %1118 = vmatpush1.msra.mxu0 0.0
    %1119 = vmatprep.subr.mxu0 0.0
    %1120 = vmatpush1.msra.mxu0 0.0
    %1121 = vmatprep.subr.mxu0 0.0
    %1122 = vmatpush1.msra.mxu0 0.0
    %1123 = vmatprep.subr.mxu0 0.0
    %1124 = vmatpush1.msra.mxu0 0.0
    %1125 = vmatprep.subr.mxu0 0.0
    %1126 = vmatpush1.msra.mxu0 0.0
    %1127 = vmatprep.subr.mxu0 0.0
    %1128 = vmatpush1.msra.mxu0 0.0
    %1129 = vmatprep.subr.mxu0 0.0
    %1130 = vmatpush1.msra.mxu0 0.0
    %1131 = vmatprep.subr.mxu0 0.0
    %1132 = vmatpush1.msra.mxu0 0.0
    %1133 = vmatprep.subr.mxu0 0.0
    %1134 = vmatpush1.msra.mxu0 0.0
    %1135 = vmatprep.subr.mxu0 0.0
    %1136 = vmatpush1.msra.mxu0 0.0
    %1137 = vmatprep.subr.mxu0 0.0
    %1138 = vmatpush1.msra.mxu0 0.0
    %1139 = vmatprep.subr.mxu0 0.0
    %1140 = vmatpush1.msra.mxu0 0.0
    %1141 = vmatprep.subr.mxu0 0.0
    %1142 = vmatpush1.msra.mxu0 0.0
    %1143 = vmatprep.subr.mxu0 0.0
    %1144 = vmatpush1.msra.mxu0 0.0
    %1145 = vmatprep.subr.mxu0 0.0
    %1146 = vmatpush1.msra.mxu0 0.0
    %1147 = vmatprep.subr.mxu0 0.0
    %1148 = vmatpush1.msra.mxu0 0.0
    %1149 = vmatprep.subr.mxu0 0.0
    %1150 = vmatpush1.msra.mxu0 0.0
    %1151 = vmatprep.subr.mxu0 0.0
    %1152 = vmatpush1.msra.mxu0 0.0
    %1153 = vmatprep.subr.mxu0 0.0
    %1154 = vmatpush1.msra.mxu0 0.0
    %1155 = vmatprep.subr.mxu0 0.0
    %1156 = vmatpush1.msra.mxu0 0.0
    %1157 = vmatprep.subr.mxu0 0.0
    %1158 = vmatpush1.msra.mxu0 0.0
    %1159 = vmatprep.subr.mxu0 0.0
    %1160 = vmatpush1.msra.mxu0 0.0
    %1161 = vmatprep.mubr.f32.mxu0 0.0
    %v1162 = vand.u32 %v703, 4294901760
    %1163 = vmatmul.mubr.f32.gmra.mrb[0].mxu0 %v1162
    %v1164 = vpop.f32.mrb[0].mxu0
    %v1165 = vadd.f32 %v1092, %v1164
    %v1166 = vpop.f32.mrb[0].mxu0
    %1167 = vdwg.mxu0
    %v1168 = vld [vmem:[%s4] sm:$0x1]
    %v1170 = vlaneseq
    %v1171 = vshrl.u32 %v1170, 7
    %v1172 = vsub.s32 0, %v1171
    %v1173 = vrot.slane %v1168, %v1172
    %v1175 = vadd.f32 %v1165, %v1173
    %v1176 = vtanh.pop %v1175
    %v1177 = vsub.f32 %v40, %v1176
    %v1178 = vmul.f32 %v1177, -1.0
    %v1179 = vadd.f32 %v40, %v1178
    %1180 = vst [vmem:[#allocation2] sm:$0xff] %v1179
    %1181 = vst [vmem:[%s5] sm:$0xff] %v1179
    // Predicated region
    $region30: #{_cfc_sequence_impl.1} parent=1 // pred_check
      _
    $region31: #{_cfc_sequence_impl.1} parent=1 // pred_check_branch
      %1183 = sbr.rel (0) target = $region33
    $region32: #{_cfc_sequence_impl.1} parent=1 // pred_region
      _
    $region33: #{_cfc_sequence_impl.1} parent=1 // pred_fallthru
      _
    // Predicated region
    $region34: #{_cfc_sequence_impl.1} parent=1 // pred_check
      _
    $region35: #{_cfc_sequence_impl.1} parent=1 // pred_check_branch
      %1185 = sbr.rel (0) target = $region37
    $region36: #{_cfc_sequence_impl.1} parent=1 // pred_region
      _
    $region37: #{_cfc_sequence_impl.1} parent=1 // pred_fallthru
      _
    %1186 = vsyncpa [#allocation4], 1

</llo_original>
